<compile_context>
chip_gen: v6e
topology: v6e:2x2x1
jax: 0.10.0
libtpu: 0.0.40
codegen_flags: <defaults>
</compile_context>

<pallas_src>
import jax
import jax.numpy as jnp
from jax import lax
from jax.experimental import pallas as pl
from jax.experimental.pallas import tpu as pltpu

N_CLASS = 16
N_HIDDEN = 32
BATCH = 4
T_ENC = 8
T_DEC = 8
SUBLANE = 8  # f32 sublane group


def seq2seq_kernel(enc_x_ref, dec_x_ref, h0_ref,
                   wih_e_ref, whh_e_ref, b_e_ref,
                   wih_d_ref, whh_d_ref, b_d_ref,
                   wfc_ref, bfc_ref,
                   out_ref):
    """Whole-model kernel: encoder recurrence, decoder recurrence, fc.

    enc_x_ref: (T_enc*BP, C) time-major rows (row = t*BP + b), batch padded to BP=8
    dec_x_ref: (T_dec*BP, C)   h0_ref: (BP, H)
    wih_*: (C, H)  whh_*: (H, H)  b_*: (1, H) pre-summed  wfc: (H, C)  bfc: (1, C)
    out_ref: (T_dec*BP, n_class)
    """
    bp = h0_ref.shape[0]
    t_enc = enc_x_ref.shape[0] // bp
    t_dec = dec_x_ref.shape[0] // bp

    # ---- hoisted input projections (bias folded in), off the serial chain ----
    # Kept as traced values (vreg-resident); ~8 KB each, no spill risk.
    xpe = jnp.dot(enc_x_ref[...], wih_e_ref[...],
                  preferred_element_type=jnp.float32) + b_e_ref[...]
    xpd = jnp.dot(dec_x_ref[...], wih_d_ref[...],
                  preferred_element_type=jnp.float32) + b_d_ref[...]

    # ---- recurrent weights: load once, bf16 for single-pass MXU per step ----
    whh_e = whh_e_ref[...].astype(jnp.bfloat16)
    whh_d = whh_d_ref[...].astype(jnp.bfloat16)

    # ---- encoder recurrence: only the final hidden state is needed ----
    # h stays a traced value; static Python loop => fully unrolled.
    h = h0_ref[...]                                        # (BP, H)
    for t in range(t_enc):
        hw = jnp.dot(h.astype(jnp.bfloat16), whh_e,
                     preferred_element_type=jnp.float32)
        h = jnp.tanh(xpe[t * bp:(t + 1) * bp, :] + hw)

    # ---- decoder recurrence: keep hidden states as traced values ----
    dec_hs = []
    for t in range(t_dec):
        hw = jnp.dot(h.astype(jnp.bfloat16), whh_d,
                     preferred_element_type=jnp.float32)
        h = jnp.tanh(xpd[t * bp:(t + 1) * bp, :] + hw)
        dec_hs.append(h)

    # ---- single fc matmul + bias, one bulk store ----
    hdec = jnp.concatenate(dec_hs, axis=0)                 # (T_dec*BP, H)
    out_ref[...] = (jnp.dot(hdec, wfc_ref[...],
                            preferred_element_type=jnp.float32)
                    + bfc_ref[...]).astype(out_ref.dtype)


def seq2seq_forward(enc_input, enc_hidden, dec_input, params):
    """enc_input: (B, T_enc, C), enc_hidden: (1, B, H), dec_input: (B, T_dec, C).

    Returns (T_dec, B, C) -- identical layout to the PyTorch module's output.
    """
    b, t_enc, c_in = enc_input.shape
    _, t_dec, _ = dec_input.shape
    n_hidden = params["w_hh_e"].shape[0]
    n_class = params["w_fc"].shape[1]

    # pad batch up to a full f32 sublane group (8 rows): every per-step slab
    # inside the kernel is then a clean, aligned full-tile slice.
    bp = max(SUBLANE, ((b + SUBLANE - 1) // SUBLANE) * SUBLANE)

    def to_time_major_padded(x, t):
        x = jnp.transpose(x, (1, 0, 2))                    # (T, B, C)
        x = jnp.pad(x, ((0, 0), (0, bp - b), (0, 0)))      # (T, BP, C)
        return x.reshape(t * bp, x.shape[-1])

    enc_x = to_time_major_padded(enc_input, t_enc)
    dec_x = to_time_major_padded(dec_input, t_dec)
    h0 = jnp.pad(enc_hidden[0], ((0, bp - b), (0, 0)))     # (BP, H)

    vmem = pl.BlockSpec(memory_space=pltpu.MemorySpace.VMEM)
    out_flat = pl.pallas_call(
        seq2seq_kernel,
        out_shape=jax.ShapeDtypeStruct((t_dec * bp, n_class), jnp.float32),
        in_specs=[vmem] * 11,
        out_specs=vmem,
    )(enc_x, dec_x, h0,
      params["w_ih_e"], params["w_hh_e"], params["b_e"],
      params["w_ih_d"], params["w_hh_d"], params["b_d"],
      params["w_fc"], params["b_fc"])

    # rows are t-major (row = t*BP + b) -> free reshape, drop padded batch rows
    return out_flat.reshape(t_dec, bp, n_class)[:, :b, :]


def init_params(key, n_class, n_hidden):
    """Deterministic init mirroring PyTorch's U(-1/sqrt(H), 1/sqrt(H))."""
    k = 1.0 / jnp.sqrt(jnp.float32(n_hidden))
    keys = jax.random.split(key, 11)

    def u(kk, shape):
        return jax.random.uniform(kk, shape, jnp.float32, -k, k)

    return {
        # encoder RNN (weights pre-transposed to (in, out); biases pre-summed)
        "w_ih_e": u(keys[0], (n_class, n_hidden)),
        "w_hh_e": u(keys[1], (n_hidden, n_hidden)),
        "b_e": u(keys[2], (1, n_hidden)) + u(keys[3], (1, n_hidden)),
        # decoder RNN
        "w_ih_d": u(keys[4], (n_class, n_hidden)),
        "w_hh_d": u(keys[5], (n_hidden, n_hidden)),
        "b_d": u(keys[6], (1, n_hidden)) + u(keys[7], (1, n_hidden)),
        # fc
        "w_fc": u(keys[8], (n_hidden, n_class)),
        "b_fc": u(keys[9], (1, n_class)),
    }


def _rnn_scan(xs, h0, wih, whh, b, bf16_recurrent):
    """Reference RNN. If bf16_recurrent, mirrors the kernel's bf16 h@W_hh."""
    if bf16_recurrent:
        whh_c = whh.astype(jnp.bfloat16)

    def step(h, x):
        if bf16_recurrent:
            hw = jnp.dot(h.astype(jnp.bfloat16), whh_c,
                         preferred_element_type=jnp.float32)
        else:
            hw = h @ whh
        h = jnp.tanh(x @ wih + hw + b)
        return h, h

    return lax.scan(step, h0, xs)


def seq2seq_reference(enc_input, enc_hidden, dec_input, params,
                      bf16_recurrent=False):
    """Pure-JAX reference of the PyTorch forward for correctness checking."""
    enc_x = jnp.transpose(enc_input, (1, 0, 2))
    dec_x = jnp.transpose(dec_input, (1, 0, 2))
    h = enc_hidden[0]

    h, _ = _rnn_scan(enc_x, h, params["w_ih_e"], params["w_hh_e"],
                     params["b_e"], bf16_recurrent)
    _, dec_outs = _rnn_scan(dec_x, h, params["w_ih_d"], params["w_hh_d"],
                            params["b_d"], bf16_recurrent)   # (T_dec, B, H)
    return dec_outs @ params["w_fc"] + params["b_fc"]


if __name__ == "__main__":
    key = jax.random.PRNGKey(0)
    k_p, k_e, k_h, k_d = jax.random.split(key, 4)

    params = init_params(k_p, N_CLASS, N_HIDDEN)
    enc_input = jax.random.normal(k_e, (BATCH, T_ENC, N_CLASS), jnp.float32)
    enc_hidden = jax.random.normal(k_h, (1, BATCH, N_HIDDEN), jnp.float32)
    dec_input = jax.random.normal(k_d, (BATCH, T_DEC, N_CLASS), jnp.float32)

    out = seq2seq_forward(enc_input, enc_hidden, dec_input, params)
    out = jax.block_until_ready(out)
    assert out.shape == (T_DEC, BATCH, N_CLASS), out.shape

    # matched-precision reference (bf16 recurrent dots, like the kernel)
    ref_matched = seq2seq_reference(enc_input, enc_hidden, dec_input, params,
                                    bf16_recurrent=True)
    assert jnp.allclose(out, ref_matched, atol=5e-3, rtol=5e-3), \
        "mismatch vs matched-precision JAX reference"

    # full-f32 reference (PyTorch math); loose tolerance covers the bf16
    # recurrent-weight quantization accumulated over 16 tanh steps.
    ref_f32 = seq2seq_reference(enc_input, enc_hidden, dec_input, params,
                                bf16_recurrent=False)
    assert jnp.allclose(out, ref_f32, atol=5e-2, rtol=5e-2), \
        "mismatch vs f32 JAX reference"

    print("KERNEL_OK")
</pallas_src>

<mosaic_0001>
module attributes {stable_mosaic.version = 11 : i64} {
  func.func @seq2seq_kernel(%arg0: memref<64x16xf32, #tpu.memory_space<vmem>>, %arg1: memref<64x16xf32, #tpu.memory_space<vmem>>, %arg2: memref<8x32xf32, #tpu.memory_space<vmem>>, %arg3: memref<16x32xf32, #tpu.memory_space<vmem>>, %arg4: memref<32x32xf32, #tpu.memory_space<vmem>>, %arg5: memref<1x32xf32, #tpu.memory_space<vmem>>, %arg6: memref<16x32xf32, #tpu.memory_space<vmem>>, %arg7: memref<32x32xf32, #tpu.memory_space<vmem>>, %arg8: memref<1x32xf32, #tpu.memory_space<vmem>>, %arg9: memref<32x16xf32, #tpu.memory_space<vmem>>, %arg10: memref<1x16xf32, #tpu.memory_space<vmem>>, %arg11: memref<64x16xf32, #tpu.memory_space<vmem>>) attributes {dimension_semantics = [], scalar_prefetch = 0 : i64, scratch_operands = 0 : i64, tpu.core_type = #tpu.core_type<tc>} {
    %c0 = arith.constant 0 : index
    %c0_0 = arith.constant 0 : index
    %0 = vector.load %arg0[%c0, %c0_0] : memref<64x16xf32, #tpu.memory_space<vmem>>, vector<64x16xf32>
    %c0_1 = arith.constant 0 : index
    %c0_2 = arith.constant 0 : index
    %1 = vector.load %arg3[%c0_1, %c0_2] : memref<16x32xf32, #tpu.memory_space<vmem>>, vector<16x32xf32>
    %cst = arith.constant dense<0.000000e+00> : vector<64x32xf32>
    %2 = tpu.matmul %0, %1, %cst {dimension_numbers = #tpu.dot_dimension_numbers<[1], [0], [0], [1], [0, 0, 1, 1], [], []>} : vector<64x16xf32>, vector<16x32xf32>, vector<64x32xf32> -> vector<64x32xf32>
    %c0_3 = arith.constant 0 : index
    %c0_4 = arith.constant 0 : index
    %3 = vector.load %arg5[%c0_3, %c0_4] : memref<1x32xf32, #tpu.memory_space<vmem>>, vector<1x32xf32>
    %4 = vector.broadcast %3 : vector<1x32xf32> to vector<64x32xf32>
    %5 = arith.addf %2, %4 : vector<64x32xf32>
    %c0_5 = arith.constant 0 : index
    %c0_6 = arith.constant 0 : index
    %6 = vector.load %arg1[%c0_5, %c0_6] : memref<64x16xf32, #tpu.memory_space<vmem>>, vector<64x16xf32>
    %c0_7 = arith.constant 0 : index
    %c0_8 = arith.constant 0 : index
    %7 = vector.load %arg6[%c0_7, %c0_8] : memref<16x32xf32, #tpu.memory_space<vmem>>, vector<16x32xf32>
    %cst_9 = arith.constant dense<0.000000e+00> : vector<64x32xf32>
    %8 = tpu.matmul %6, %7, %cst_9 {dimension_numbers = #tpu.dot_dimension_numbers<[1], [0], [0], [1], [0, 0, 1, 1], [], []>} : vector<64x16xf32>, vector<16x32xf32>, vector<64x32xf32> -> vector<64x32xf32>
    %c0_10 = arith.constant 0 : index
    %c0_11 = arith.constant 0 : index
    %9 = vector.load %arg8[%c0_10, %c0_11] : memref<1x32xf32, #tpu.memory_space<vmem>>, vector<1x32xf32>
    %10 = vector.broadcast %9 : vector<1x32xf32> to vector<64x32xf32>
    %11 = arith.addf %8, %10 : vector<64x32xf32>
    %c0_12 = arith.constant 0 : index
    %c0_13 = arith.constant 0 : index
    %12 = vector.load %arg4[%c0_12, %c0_13] : memref<32x32xf32, #tpu.memory_space<vmem>>, vector<32x32xf32>
    %13 = arith.truncf %12 : vector<32x32xf32> to vector<32x32xbf16>
    %c0_14 = arith.constant 0 : index
    %c0_15 = arith.constant 0 : index
    %14 = vector.load %arg7[%c0_14, %c0_15] : memref<32x32xf32, #tpu.memory_space<vmem>>, vector<32x32xf32>
    %15 = arith.truncf %14 : vector<32x32xf32> to vector<32x32xbf16>
    %c0_16 = arith.constant 0 : index
    %c0_17 = arith.constant 0 : index
    %16 = vector.load %arg2[%c0_16, %c0_17] : memref<8x32xf32, #tpu.memory_space<vmem>>, vector<8x32xf32>
    %17 = arith.truncf %16 : vector<8x32xf32> to vector<8x32xbf16>
    %cst_18 = arith.constant dense<0.000000e+00> : vector<8x32xf32>
    %18 = tpu.matmul %17, %13, %cst_18 {dimension_numbers = #tpu.dot_dimension_numbers<[1], [0], [0], [1], [0, 0, 1, 1], [], []>} : vector<8x32xbf16>, vector<32x32xbf16>, vector<8x32xf32> -> vector<8x32xf32>
    %19 = vector.extract_strided_slice %5 {offsets = [0, 0], sizes = [8, 32], strides = [1, 1]} : vector<64x32xf32> to vector<8x32xf32>
    %20 = arith.addf %19, %18 : vector<8x32xf32>
    %21 = math.tanh %20 : vector<8x32xf32>
    %22 = arith.truncf %21 : vector<8x32xf32> to vector<8x32xbf16>
    %cst_19 = arith.constant dense<0.000000e+00> : vector<8x32xf32>
    %23 = tpu.matmul %22, %13, %cst_19 {dimension_numbers = #tpu.dot_dimension_numbers<[1], [0], [0], [1], [0, 0, 1, 1], [], []>} : vector<8x32xbf16>, vector<32x32xbf16>, vector<8x32xf32> -> vector<8x32xf32>
    %24 = vector.extract_strided_slice %5 {offsets = [8, 0], sizes = [8, 32], strides = [1, 1]} : vector<64x32xf32> to vector<8x32xf32>
    %25 = arith.addf %24, %23 : vector<8x32xf32>
    %26 = math.tanh %25 : vector<8x32xf32>
    %27 = arith.truncf %26 : vector<8x32xf32> to vector<8x32xbf16>
    %cst_20 = arith.constant dense<0.000000e+00> : vector<8x32xf32>
    %28 = tpu.matmul %27, %13, %cst_20 {dimension_numbers = #tpu.dot_dimension_numbers<[1], [0], [0], [1], [0, 0, 1, 1], [], []>} : vector<8x32xbf16>, vector<32x32xbf16>, vector<8x32xf32> -> vector<8x32xf32>
    %29 = vector.extract_strided_slice %5 {offsets = [16, 0], sizes = [8, 32], strides = [1, 1]} : vector<64x32xf32> to vector<8x32xf32>
    %30 = arith.addf %29, %28 : vector<8x32xf32>
    %31 = math.tanh %30 : vector<8x32xf32>
    %32 = arith.truncf %31 : vector<8x32xf32> to vector<8x32xbf16>
    %cst_21 = arith.constant dense<0.000000e+00> : vector<8x32xf32>
    %33 = tpu.matmul %32, %13, %cst_21 {dimension_numbers = #tpu.dot_dimension_numbers<[1], [0], [0], [1], [0, 0, 1, 1], [], []>} : vector<8x32xbf16>, vector<32x32xbf16>, vector<8x32xf32> -> vector<8x32xf32>
    %34 = vector.extract_strided_slice %5 {offsets = [24, 0], sizes = [8, 32], strides = [1, 1]} : vector<64x32xf32> to vector<8x32xf32>
    %35 = arith.addf %34, %33 : vector<8x32xf32>
    %36 = math.tanh %35 : vector<8x32xf32>
    %37 = arith.truncf %36 : vector<8x32xf32> to vector<8x32xbf16>
    %cst_22 = arith.constant dense<0.000000e+00> : vector<8x32xf32>
    %38 = tpu.matmul %37, %13, %cst_22 {dimension_numbers = #tpu.dot_dimension_numbers<[1], [0], [0], [1], [0, 0, 1, 1], [], []>} : vector<8x32xbf16>, vector<32x32xbf16>, vector<8x32xf32> -> vector<8x32xf32>
    %39 = vector.extract_strided_slice %5 {offsets = [32, 0], sizes = [8, 32], strides = [1, 1]} : vector<64x32xf32> to vector<8x32xf32>
    %40 = arith.addf %39, %38 : vector<8x32xf32>
    %41 = math.tanh %40 : vector<8x32xf32>
    %42 = arith.truncf %41 : vector<8x32xf32> to vector<8x32xbf16>
    %cst_23 = arith.constant dense<0.000000e+00> : vector<8x32xf32>
    %43 = tpu.matmul %42, %13, %cst_23 {dimension_numbers = #tpu.dot_dimension_numbers<[1], [0], [0], [1], [0, 0, 1, 1], [], []>} : vector<8x32xbf16>, vector<32x32xbf16>, vector<8x32xf32> -> vector<8x32xf32>
    %44 = vector.extract_strided_slice %5 {offsets = [40, 0], sizes = [8, 32], strides = [1, 1]} : vector<64x32xf32> to vector<8x32xf32>
    %45 = arith.addf %44, %43 : vector<8x32xf32>
    %46 = math.tanh %45 : vector<8x32xf32>
    %47 = arith.truncf %46 : vector<8x32xf32> to vector<8x32xbf16>
    %cst_24 = arith.constant dense<0.000000e+00> : vector<8x32xf32>
    %48 = tpu.matmul %47, %13, %cst_24 {dimension_numbers = #tpu.dot_dimension_numbers<[1], [0], [0], [1], [0, 0, 1, 1], [], []>} : vector<8x32xbf16>, vector<32x32xbf16>, vector<8x32xf32> -> vector<8x32xf32>
    %49 = vector.extract_strided_slice %5 {offsets = [48, 0], sizes = [8, 32], strides = [1, 1]} : vector<64x32xf32> to vector<8x32xf32>
    %50 = arith.addf %49, %48 : vector<8x32xf32>
    %51 = math.tanh %50 : vector<8x32xf32>
    %52 = arith.truncf %51 : vector<8x32xf32> to vector<8x32xbf16>
    %cst_25 = arith.constant dense<0.000000e+00> : vector<8x32xf32>
    %53 = tpu.matmul %52, %13, %cst_25 {dimension_numbers = #tpu.dot_dimension_numbers<[1], [0], [0], [1], [0, 0, 1, 1], [], []>} : vector<8x32xbf16>, vector<32x32xbf16>, vector<8x32xf32> -> vector<8x32xf32>
    %54 = vector.extract_strided_slice %5 {offsets = [56, 0], sizes = [8, 32], strides = [1, 1]} : vector<64x32xf32> to vector<8x32xf32>
    %55 = arith.addf %54, %53 : vector<8x32xf32>
    %56 = math.tanh %55 : vector<8x32xf32>
    %57 = arith.truncf %56 : vector<8x32xf32> to vector<8x32xbf16>
    %cst_26 = arith.constant dense<0.000000e+00> : vector<8x32xf32>
    %58 = tpu.matmul %57, %15, %cst_26 {dimension_numbers = #tpu.dot_dimension_numbers<[1], [0], [0], [1], [0, 0, 1, 1], [], []>} : vector<8x32xbf16>, vector<32x32xbf16>, vector<8x32xf32> -> vector<8x32xf32>
    %59 = vector.extract_strided_slice %11 {offsets = [0, 0], sizes = [8, 32], strides = [1, 1]} : vector<64x32xf32> to vector<8x32xf32>
    %60 = arith.addf %59, %58 : vector<8x32xf32>
    %61 = math.tanh %60 : vector<8x32xf32>
    %62 = arith.truncf %61 : vector<8x32xf32> to vector<8x32xbf16>
    %cst_27 = arith.constant dense<0.000000e+00> : vector<8x32xf32>
    %63 = tpu.matmul %62, %15, %cst_27 {dimension_numbers = #tpu.dot_dimension_numbers<[1], [0], [0], [1], [0, 0, 1, 1], [], []>} : vector<8x32xbf16>, vector<32x32xbf16>, vector<8x32xf32> -> vector<8x32xf32>
    %64 = vector.extract_strided_slice %11 {offsets = [8, 0], sizes = [8, 32], strides = [1, 1]} : vector<64x32xf32> to vector<8x32xf32>
    %65 = arith.addf %64, %63 : vector<8x32xf32>
    %66 = math.tanh %65 : vector<8x32xf32>
    %67 = arith.truncf %66 : vector<8x32xf32> to vector<8x32xbf16>
    %cst_28 = arith.constant dense<0.000000e+00> : vector<8x32xf32>
    %68 = tpu.matmul %67, %15, %cst_28 {dimension_numbers = #tpu.dot_dimension_numbers<[1], [0], [0], [1], [0, 0, 1, 1], [], []>} : vector<8x32xbf16>, vector<32x32xbf16>, vector<8x32xf32> -> vector<8x32xf32>
    %69 = vector.extract_strided_slice %11 {offsets = [16, 0], sizes = [8, 32], strides = [1, 1]} : vector<64x32xf32> to vector<8x32xf32>
    %70 = arith.addf %69, %68 : vector<8x32xf32>
    %71 = math.tanh %70 : vector<8x32xf32>
    %72 = arith.truncf %71 : vector<8x32xf32> to vector<8x32xbf16>
    %cst_29 = arith.constant dense<0.000000e+00> : vector<8x32xf32>
    %73 = tpu.matmul %72, %15, %cst_29 {dimension_numbers = #tpu.dot_dimension_numbers<[1], [0], [0], [1], [0, 0, 1, 1], [], []>} : vector<8x32xbf16>, vector<32x32xbf16>, vector<8x32xf32> -> vector<8x32xf32>
    %74 = vector.extract_strided_slice %11 {offsets = [24, 0], sizes = [8, 32], strides = [1, 1]} : vector<64x32xf32> to vector<8x32xf32>
    %75 = arith.addf %74, %73 : vector<8x32xf32>
    %76 = math.tanh %75 : vector<8x32xf32>
    %77 = arith.truncf %76 : vector<8x32xf32> to vector<8x32xbf16>
    %cst_30 = arith.constant dense<0.000000e+00> : vector<8x32xf32>
    %78 = tpu.matmul %77, %15, %cst_30 {dimension_numbers = #tpu.dot_dimension_numbers<[1], [0], [0], [1], [0, 0, 1, 1], [], []>} : vector<8x32xbf16>, vector<32x32xbf16>, vector<8x32xf32> -> vector<8x32xf32>
    %79 = vector.extract_strided_slice %11 {offsets = [32, 0], sizes = [8, 32], strides = [1, 1]} : vector<64x32xf32> to vector<8x32xf32>
    %80 = arith.addf %79, %78 : vector<8x32xf32>
    %81 = math.tanh %80 : vector<8x32xf32>
    %82 = arith.truncf %81 : vector<8x32xf32> to vector<8x32xbf16>
    %cst_31 = arith.constant dense<0.000000e+00> : vector<8x32xf32>
    %83 = tpu.matmul %82, %15, %cst_31 {dimension_numbers = #tpu.dot_dimension_numbers<[1], [0], [0], [1], [0, 0, 1, 1], [], []>} : vector<8x32xbf16>, vector<32x32xbf16>, vector<8x32xf32> -> vector<8x32xf32>
    %84 = vector.extract_strided_slice %11 {offsets = [40, 0], sizes = [8, 32], strides = [1, 1]} : vector<64x32xf32> to vector<8x32xf32>
    %85 = arith.addf %84, %83 : vector<8x32xf32>
    %86 = math.tanh %85 : vector<8x32xf32>
    %87 = arith.truncf %86 : vector<8x32xf32> to vector<8x32xbf16>
    %cst_32 = arith.constant dense<0.000000e+00> : vector<8x32xf32>
    %88 = tpu.matmul %87, %15, %cst_32 {dimension_numbers = #tpu.dot_dimension_numbers<[1], [0], [0], [1], [0, 0, 1, 1], [], []>} : vector<8x32xbf16>, vector<32x32xbf16>, vector<8x32xf32> -> vector<8x32xf32>
    %89 = vector.extract_strided_slice %11 {offsets = [48, 0], sizes = [8, 32], strides = [1, 1]} : vector<64x32xf32> to vector<8x32xf32>
    %90 = arith.addf %89, %88 : vector<8x32xf32>
    %91 = math.tanh %90 : vector<8x32xf32>
    %92 = arith.truncf %91 : vector<8x32xf32> to vector<8x32xbf16>
    %cst_33 = arith.constant dense<0.000000e+00> : vector<8x32xf32>
    %93 = tpu.matmul %92, %15, %cst_33 {dimension_numbers = #tpu.dot_dimension_numbers<[1], [0], [0], [1], [0, 0, 1, 1], [], []>} : vector<8x32xbf16>, vector<32x32xbf16>, vector<8x32xf32> -> vector<8x32xf32>
    %94 = vector.extract_strided_slice %11 {offsets = [56, 0], sizes = [8, 32], strides = [1, 1]} : vector<64x32xf32> to vector<8x32xf32>
    %95 = arith.addf %94, %93 : vector<8x32xf32>
    %96 = math.tanh %95 : vector<8x32xf32>
    %97 = tpu.concatenate %61, %66, %71, %76, %81, %86, %91, %96 in 0 : vector<8x32xf32>, vector<8x32xf32>, vector<8x32xf32>, vector<8x32xf32>, vector<8x32xf32>, vector<8x32xf32>, vector<8x32xf32>, vector<8x32xf32> -> vector<64x32xf32>
    %c0_34 = arith.constant 0 : index
    %c0_35 = arith.constant 0 : index
    %98 = vector.load %arg9[%c0_34, %c0_35] : memref<32x16xf32, #tpu.memory_space<vmem>>, vector<32x16xf32>
    %cst_36 = arith.constant dense<0.000000e+00> : vector<64x16xf32>
    %99 = tpu.matmul %97, %98, %cst_36 {dimension_numbers = #tpu.dot_dimension_numbers<[1], [0], [0], [1], [0, 0, 1, 1], [], []>} : vector<64x32xf32>, vector<32x16xf32>, vector<64x16xf32> -> vector<64x16xf32>
    %c0_37 = arith.constant 0 : index
    %c0_38 = arith.constant 0 : index
    %100 = vector.load %arg10[%c0_37, %c0_38] : memref<1x16xf32, #tpu.memory_space<vmem>>, vector<1x16xf32>
    %101 = vector.broadcast %100 : vector<1x16xf32> to vector<64x16xf32>
    %102 = arith.addf %99, %101 : vector<64x16xf32>
    %c0_39 = arith.constant 0 : index
    %c0_40 = arith.constant 0 : index
    %103 = vector.load %arg11[%c0_39, %c0_40] : memref<64x16xf32, #tpu.memory_space<vmem>>, vector<64x16xf32>
    tpu.vector_store %arg11[%c0_39, %c0_40], %102 {strides = array<i32>} : memref<64x16xf32, #tpu.memory_space<vmem>>, vector<64x16xf32>,
    return
  }
}

</mosaic_0001>

<llo_original>
// kernel: tpu_custom_call.1
$region0: #{tpu_custom_call.1}
  #allocation0 [shape = 'u32[]', space=smem, size = 0x4, offset = 0x4, fixed_abs, tag = 'smem constant byte address 0x4 - core index']
  #allocation1 [shape = 'u32[144,128]{1,0:T(1,128)}', space=vmem, size = 0x12000, scoped, tag = 'internal scratch']
  %s0 = inlined_call_operand.vmem [shape: f32[64,16], index: 0, kind: input, shape index: {}]
  %s1 = inlined_call_operand.vmem [shape: f32[64,16], index: 1, kind: input, shape index: {}]
  %s2 = inlined_call_operand.vmem [shape: f32[8,32], index: 2, kind: input, shape index: {}]
  %s3 = inlined_call_operand.vmem [shape: f32[16,32], index: 3, kind: input, shape index: {}]
  %s4 = inlined_call_operand.vmem [shape: f32[32,32], index: 4, kind: input, shape index: {}]
  %s5 = inlined_call_operand.vmem [shape: f32[1,32], index: 5, kind: input, shape index: {}]
  %s6 = inlined_call_operand.vmem [shape: f32[16,32], index: 6, kind: input, shape index: {}]
  %s7 = inlined_call_operand.vmem [shape: f32[32,32], index: 7, kind: input, shape index: {}]
  %s8 = inlined_call_operand.vmem [shape: f32[1,32], index: 8, kind: input, shape index: {}]
  %s9 = inlined_call_operand.vmem [shape: f32[32,16], index: 9, kind: input, shape index: {}]
  %s10 = inlined_call_operand.vmem [shape: f32[1,16], index: 10, kind: input, shape index: {}]
  %s11 = inlined_call_operand.vmem [shape: f32[64,16], index: 11, kind: output, shape index: {}]
  %s12 = sld [smem:[#allocation0]]
  $region54: #{tpu_custom_call.1} parent=0
    _
  %s14 = ssub.s32 1, %s12
  %s15 = scalar_select 0, %s14, %s12
  // Predicated region
  $region2: #{tpu_custom_call.1} parent=0 // pred_check
    _
  $region3: #{tpu_custom_call.1} parent=0 // pred_check_branch
    %17 = sbr.rel (0) target = $region5
  $region4: #{tpu_custom_call.1} parent=0 // pred_region
    _
  $region5: #{tpu_custom_call.1} parent=0 // pred_fallthru
    _
  // Predicated region
  $region6: #{tpu_custom_call.1} parent=0 // pred_check
    _
  $region7: #{tpu_custom_call.1} parent=0 // pred_check_branch
    %19 = sbr.rel (0) target = $region9
  $region8: #{tpu_custom_call.1} parent=0 // pred_region
    _
  $region9: #{tpu_custom_call.1} parent=0 // pred_fallthru
    _
  // Predicated region
  $region10: #{tpu_custom_call.1} parent=0 // pred_check
    _
  $region11: #{tpu_custom_call.1} parent=0 // pred_check_branch
    %21 = sbr.rel (0) target = $region13
  $region12: #{tpu_custom_call.1} parent=0 // pred_region
    _
  $region13: #{tpu_custom_call.1} parent=0 // pred_fallthru
    _
  // Predicated region
  $region14: #{tpu_custom_call.1} parent=0 // pred_check
    _
  $region15: #{tpu_custom_call.1} parent=0 // pred_check_branch
    %23 = sbr.rel (0) target = $region17
  $region16: #{tpu_custom_call.1} parent=0 // pred_region
    _
  $region17: #{tpu_custom_call.1} parent=0 // pred_fallthru
    _
  // Predicated region
  $region18: #{tpu_custom_call.1} parent=0 // pred_check
    _
  $region19: #{tpu_custom_call.1} parent=0 // pred_check_branch
    %25 = sbr.rel (0) target = $region21
  $region20: #{tpu_custom_call.1} parent=0 // pred_region
    _
  $region21: #{tpu_custom_call.1} parent=0 // pred_fallthru
    _
  // Predicated region
  $region22: #{tpu_custom_call.1} parent=0 // pred_check
    _
  $region23: #{tpu_custom_call.1} parent=0 // pred_check_branch
    %27 = sbr.rel (0) target = $region25
  $region24: #{tpu_custom_call.1} parent=0 // pred_region
    _
  $region25: #{tpu_custom_call.1} parent=0 // pred_fallthru
    _
  // Predicated region
  $region26: #{tpu_custom_call.1} parent=0 // pred_check
    _
  $region27: #{tpu_custom_call.1} parent=0 // pred_check_branch
    %29 = sbr.rel (0) target = $region29
  $region28: #{tpu_custom_call.1} parent=0 // pred_region
    _
  $region29: #{tpu_custom_call.1} parent=0 // pred_fallthru
    _
  // Predicated region
  $region30: #{tpu_custom_call.1} parent=0 // pred_check
    _
  $region31: #{tpu_custom_call.1} parent=0 // pred_check_branch
    %31 = sbr.rel (0) target = $region33
  $region32: #{tpu_custom_call.1} parent=0 // pred_region
    _
  $region33: #{tpu_custom_call.1} parent=0 // pred_fallthru
    _
  // Predicated region
  $region34: #{tpu_custom_call.1} parent=0 // pred_check
    _
  $region35: #{tpu_custom_call.1} parent=0 // pred_check_branch
    %33 = sbr.rel (0) target = $region37
  $region36: #{tpu_custom_call.1} parent=0 // pred_region
    _
  $region37: #{tpu_custom_call.1} parent=0 // pred_fallthru
    _
  // Predicated region
  $region38: #{tpu_custom_call.1} parent=0 // pred_check
    _
  $region39: #{tpu_custom_call.1} parent=0 // pred_check_branch
    %35 = sbr.rel (0) target = $region41
  $region40: #{tpu_custom_call.1} parent=0 // pred_region
    _
  $region41: #{tpu_custom_call.1} parent=0 // pred_fallthru
    _
  // Predicated region
  $region42: #{tpu_custom_call.1} parent=0 // pred_check
    _
  $region43: #{tpu_custom_call.1} parent=0 // pred_check_branch
    %37 = sbr.rel (0) target = $region45
  $region44: #{tpu_custom_call.1} parent=0 // pred_region
    _
  $region45: #{tpu_custom_call.1} parent=0 // pred_fallthru
    _
  %v39 = vld [vmem:[%s0] sm:$0xff]
  %v40 = vld [vmem:[%s0 + $0x8] sm:$0xff]
  %v41 = vld [vmem:[%s0 + $0x10] sm:$0xff]
  %v42 = vld [vmem:[%s0 + $0x18] sm:$0xff]
  %v43 = vld [vmem:[%s0 + $0x20] sm:$0xff]
  %v44 = vld [vmem:[%s0 + $0x28] sm:$0xff]
  %v45 = vld [vmem:[%s0 + $0x30] sm:$0xff]
  %v46 = vld [vmem:[%s0 + $0x38] sm:$0xff]
  %v47 = vld [vmem:[%s3] sm:$0xff]
  %v48 = vld [vmem:[%s3 + $0x8] sm:$0xff]
  %v49 = vld [vmem:[%s5] sm:$0x1]
  %v51 = vlaneseq
  %v52 = vshrl.u32 %v51, 7
  %v53 = vsub.s32 0, %v52
  %v54 = vrot.slane %v49, %v53
  %vm56 = vcmask 130048
  %v58 = vsel %vm56, %v39, 0
  %v61 = vsel %vm56, %v40, 0
  %v64 = vsel %vm56, %v41, 0
  %v67 = vsel %vm56, %v42, 0
  %v70 = vsel %vm56, %v43, 0
  %v73 = vsel %vm56, %v44, 0
  %v76 = vsel %vm56, %v45, 0
  %v79 = vsel %vm56, %v46, 0
  %81 = vmatprep.subr.mxu0 0.0
  %82 = vmatpush1.msra.mxu0 0.0
  %83 = vmatprep.subr.mxu0 0.0
  %84 = vmatpush1.msra.mxu0 0.0
  %85 = vmatprep.subr.mxu0 0.0
  %86 = vmatpush1.msra.mxu0 0.0
  %87 = vmatprep.subr.mxu0 0.0
  %88 = vmatpush1.msra.mxu0 0.0
  %89 = vmatprep.subr.mxu0 0.0
  %90 = vmatpush1.msra.mxu0 0.0
  %91 = vmatprep.subr.mxu0 0.0
  %92 = vmatpush1.msra.mxu0 0.0
  %93 = vmatprep.subr.mxu0 0.0
  %94 = vmatpush1.msra.mxu0 0.0
  %95 = vmatprep.subr.mxu0 0.0
  %96 = vmatpush1.msra.mxu0 0.0
  %97 = vmatprep.subr.mxu0 0.0
  %98 = vmatpush1.msra.mxu0 0.0
  %99 = vmatprep.subr.mxu0 0.0
  %100 = vmatpush1.msra.mxu0 0.0
  %101 = vmatprep.subr.mxu0 0.0
  %102 = vmatpush1.msra.mxu0 0.0
  %103 = vmatprep.subr.mxu0 0.0
  %104 = vmatpush1.msra.mxu0 0.0
  %105 = vmatprep.subr.mxu0 0.0
  %106 = vmatpush1.msra.mxu0 0.0
  %107 = vmatprep.subr.mxu0 0.0
  %108 = vmatpush1.msra.mxu0 0.0
  %109 = vmatprep.subr.mxu0 0.0
  %110 = vmatpush1.msra.mxu0 %v48
  %111 = vmatprep.subr.mxu0 0.0
  %112 = vmatpush1.msra.mxu0 %v47
  %113 = vmatprep.subr.mxu0 0.0
  %114 = vmatpush2.msra.mxu0 0.0
  %115 = vmatprep.subr.mxu0 0.0
  %116 = vmatpush2.msra.mxu0 0.0
  %117 = vmatprep.subr.mxu0 0.0
  %118 = vmatpush2.msra.mxu0 0.0
  %119 = vmatprep.subr.mxu0 0.0
  %120 = vmatpush2.msra.mxu0 0.0
  %121 = vmatprep.subr.mxu0 0.0
  %122 = vmatpush2.msra.mxu0 0.0
  %123 = vmatprep.subr.mxu0 0.0
  %124 = vmatpush2.msra.mxu0 0.0
  %125 = vmatprep.subr.mxu0 0.0
  %126 = vmatpush2.msra.mxu0 0.0
  %127 = vmatprep.subr.mxu0 0.0
  %128 = vmatpush2.msra.mxu0 0.0
  %129 = vmatprep.subr.mxu0 0.0
  %130 = vmatpush2.msra.mxu0 0.0
  %131 = vmatprep.subr.mxu0 0.0
  %132 = vmatpush2.msra.mxu0 0.0
  %133 = vmatprep.subr.mxu0 0.0
  %134 = vmatpush2.msra.mxu0 0.0
  %135 = vmatprep.subr.mxu0 0.0
  %136 = vmatpush2.msra.mxu0 0.0
  %137 = vmatprep.subr.mxu0 0.0
  %138 = vmatpush2.msra.mxu0 0.0
  %139 = vmatprep.subr.mxu0 0.0
  %140 = vmatpush2.msra.mxu0 0.0
  %141 = vmatprep.subr.mxu0 0.0
  %142 = vmatpush2.msra.mxu0 0.0
  %143 = vmatprep.subr.mxu0 0.0
  %144 = vmatpush2.msra.mxu0 0.0
  %145 = vmatprep.mubr.f32.mxu0 0.0
  %146 = vmatmul.mubr.f32.gmra.mxu0 %v58
  %v147 = vpop.f32.mrf.mxu0
  %v148 = vadd.f32 %v54, %v147
  %v149 = vpop.f32.mrf.mxu0
  %150 = vmatprep.mubr.f32.mxu0 0.0
  %151 = vmatmul.mubr.f32.gmra.mxu0 %v61
  %v152 = vpop.f32.mrf.mxu0
  %v153 = vadd.f32 %v54, %v152
  %v154 = vpop.f32.mrf.mxu0
  %155 = vmatprep.mubr.f32.mxu0 0.0
  %156 = vmatmul.mubr.f32.gmra.mxu0 %v64
  %v157 = vpop.f32.mrf.mxu0
  %v158 = vadd.f32 %v54, %v157
  %v159 = vpop.f32.mrf.mxu0
  %160 = vmatprep.mubr.f32.mxu0 0.0
  %161 = vmatmul.mubr.f32.gmra.mxu0 %v67
  %v162 = vpop.f32.mrf.mxu0
  %v163 = vadd.f32 %v54, %v162
  %v164 = vpop.f32.mrf.mxu0
  %165 = vmatprep.mubr.f32.mxu0 0.0
  %166 = vmatmul.mubr.f32.gmra.mxu0 %v70
  %v167 = vpop.f32.mrf.mxu0
  %v168 = vadd.f32 %v54, %v167
  %v169 = vpop.f32.mrf.mxu0
  %170 = vmatprep.mubr.f32.mxu0 0.0
  %171 = vmatmul.mubr.f32.gmra.mxu0 %v73
  %v172 = vpop.f32.mrf.mxu0
  %v173 = vadd.f32 %v54, %v172
  %v174 = vpop.f32.mrf.mxu0
  %175 = vmatprep.mubr.f32.mxu0 0.0
  %176 = vmatmul.mubr.f32.gmra.mxu0 %v76
  %v177 = vpop.f32.mrf.mxu0
  %v178 = vadd.f32 %v54, %v177
  %v179 = vpop.f32.mrf.mxu0
  %180 = vmatprep.mubr.f32.mxu0 0.0
  %181 = vmatmul.mubr.f32.gmra.mxu0 %v79
  %v182 = vpop.f32.mrf.mxu0
  %v183 = vadd.f32 %v54, %v182
  %v184 = vpop.f32.mrf.mxu0
  %185 = vdwg.mxu0
  %v186 = vld [vmem:[%s1] sm:$0xff]
  %v187 = vld [vmem:[%s1 + $0x8] sm:$0xff]
  %v188 = vld [vmem:[%s1 + $0x10] sm:$0xff]
  %v189 = vld [vmem:[%s1 + $0x18] sm:$0xff]
  %v190 = vld [vmem:[%s1 + $0x20] sm:$0xff]
  %v191 = vld [vmem:[%s1 + $0x28] sm:$0xff]
  %v192 = vld [vmem:[%s1 + $0x30] sm:$0xff]
  %v193 = vld [vmem:[%s1 + $0x38] sm:$0xff]
  %v194 = vld [vmem:[%s6] sm:$0xff]
  %v195 = vld [vmem:[%s6 + $0x8] sm:$0xff]
  %v196 = vld [vmem:[%s8] sm:$0x1]
  %v198 = vlaneseq
  %v199 = vshrl.u32 %v198, 7
  %v200 = vsub.s32 0, %v199
  %v201 = vrot.slane %v196, %v200
  %v204 = vsel %vm56, %v186, 0
  %v207 = vsel %vm56, %v187, 0
  %v210 = vsel %vm56, %v188, 0
  %v213 = vsel %vm56, %v189, 0
  %v216 = vsel %vm56, %v190, 0
  %v219 = vsel %vm56, %v191, 0
  %v222 = vsel %vm56, %v192, 0
  %v225 = vsel %vm56, %v193, 0
  %227 = vmatprep.subr.mxu0 0.0
  %228 = vmatpush1.msra.mxu0 0.0
  %229 = vmatprep.subr.mxu0 0.0
  %230 = vmatpush1.msra.mxu0 0.0
  %231 = vmatprep.subr.mxu0 0.0
  %232 = vmatpush1.msra.mxu0 0.0
  %233 = vmatprep.subr.mxu0 0.0
  %234 = vmatpush1.msra.mxu0 0.0
  %235 = vmatprep.subr.mxu0 0.0
  %236 = vmatpush1.msra.mxu0 0.0
  %237 = vmatprep.subr.mxu0 0.0
  %238 = vmatpush1.msra.mxu0 0.0
  %239 = vmatprep.subr.mxu0 0.0
  %240 = vmatpush1.msra.mxu0 0.0
  %241 = vmatprep.subr.mxu0 0.0
  %242 = vmatpush1.msra.mxu0 0.0
  %243 = vmatprep.subr.mxu0 0.0
  %244 = vmatpush1.msra.mxu0 0.0
  %245 = vmatprep.subr.mxu0 0.0
  %246 = vmatpush1.msra.mxu0 0.0
  %247 = vmatprep.subr.mxu0 0.0
  %248 = vmatpush1.msra.mxu0 0.0
  %249 = vmatprep.subr.mxu0 0.0
  %250 = vmatpush1.msra.mxu0 0.0
  %251 = vmatprep.subr.mxu0 0.0
  %252 = vmatpush1.msra.mxu0 0.0
  %253 = vmatprep.subr.mxu0 0.0
  %254 = vmatpush1.msra.mxu0 0.0
  %255 = vmatprep.subr.mxu0 0.0
  %256 = vmatpush1.msra.mxu0 %v195
  %257 = vmatprep.subr.mxu0 0.0
  %258 = vmatpush1.msra.mxu0 %v194
  %259 = vmatprep.subr.mxu0 0.0
  %260 = vmatpush2.msra.mxu0 0.0
  %261 = vmatprep.subr.mxu0 0.0
  %262 = vmatpush2.msra.mxu0 0.0
  %263 = vmatprep.subr.mxu0 0.0
  %264 = vmatpush2.msra.mxu0 0.0
  %265 = vmatprep.subr.mxu0 0.0
  %266 = vmatpush2.msra.mxu0 0.0
  %267 = vmatprep.subr.mxu0 0.0
  %268 = vmatpush2.msra.mxu0 0.0
  %269 = vmatprep.subr.mxu0 0.0
  %270 = vmatpush2.msra.mxu0 0.0
  %271 = vmatprep.subr.mxu0 0.0
  %272 = vmatpush2.msra.mxu0 0.0
  %273 = vmatprep.subr.mxu0 0.0
  %274 = vmatpush2.msra.mxu0 0.0
  %275 = vmatprep.subr.mxu0 0.0
  %276 = vmatpush2.msra.mxu0 0.0
  %277 = vmatprep.subr.mxu0 0.0
  %278 = vmatpush2.msra.mxu0 0.0
  %279 = vmatprep.subr.mxu0 0.0
  %280 = vmatpush2.msra.mxu0 0.0
  %281 = vmatprep.subr.mxu0 0.0
  %282 = vmatpush2.msra.mxu0 0.0
  %283 = vmatprep.subr.mxu0 0.0
  %284 = vmatpush2.msra.mxu0 0.0
  %285 = vmatprep.subr.mxu0 0.0
  %286 = vmatpush2.msra.mxu0 0.0
  %287 = vmatprep.subr.mxu0 0.0
  %288 = vmatpush2.msra.mxu0 0.0
  %289 = vmatprep.subr.mxu0 0.0
  %290 = vmatpush2.msra.mxu0 0.0
  %291 = vmatprep.mubr.f32.mxu0 0.0
  %292 = vmatmul.mubr.f32.gmra.mxu0 %v204
  %v293 = vpop.f32.mrf.mxu0
  %v294 = vadd.f32 %v201, %v293
  %v295 = vpop.f32.mrf.mxu0
  %296 = vmatprep.mubr.f32.mxu0 0.0
  %297 = vmatmul.mubr.f32.gmra.mxu0 %v207
  %v298 = vpop.f32.mrf.mxu0
  %v299 = vadd.f32 %v201, %v298
  %v300 = vpop.f32.mrf.mxu0
  %301 = vmatprep.mubr.f32.mxu0 0.0
  %302 = vmatmul.mubr.f32.gmra.mxu0 %v210
  %v303 = vpop.f32.mrf.mxu0
  %v304 = vadd.f32 %v201, %v303
  %v305 = vpop.f32.mrf.mxu0
  %306 = vmatprep.mubr.f32.mxu0 0.0
  %307 = vmatmul.mubr.f32.gmra.mxu0 %v213
  %v308 = vpop.f32.mrf.mxu0
  %v309 = vadd.f32 %v201, %v308
  %v310 = vpop.f32.mrf.mxu0
  %311 = vmatprep.mubr.f32.mxu0 0.0
  %312 = vmatmul.mubr.f32.gmra.mxu0 %v216
  %v313 = vpop.f32.mrf.mxu0
  %v314 = vadd.f32 %v201, %v313
  %v315 = vpop.f32.mrf.mxu0
  %316 = vmatprep.mubr.f32.mxu0 0.0
  %317 = vmatmul.mubr.f32.gmra.mxu0 %v219
  %v318 = vpop.f32.mrf.mxu0
  %v319 = vadd.f32 %v201, %v318
  %v320 = vpop.f32.mrf.mxu0
  %321 = vmatprep.mubr.f32.mxu0 0.0
  %322 = vmatmul.mubr.f32.gmra.mxu0 %v222
  %v323 = vpop.f32.mrf.mxu0
  %v324 = vadd.f32 %v201, %v323
  %v325 = vpop.f32.mrf.mxu0
  %326 = vmatprep.mubr.f32.mxu0 0.0
  %327 = vmatmul.mubr.f32.gmra.mxu0 %v225
  %v328 = vpop.f32.mrf.mxu0
  %v329 = vadd.f32 %v201, %v328
  %v330 = vpop.f32.mrf.mxu0
  %331 = vdwg.mxu0
  %v332 = vld [vmem:[%s4] sm:$0xff]
  %v333 = vld [vmem:[%s4 + $0x8] sm:$0xff]
  %v334 = vld [vmem:[%s4 + $0x10] sm:$0xff]
  %v335 = vld [vmem:[%s4 + $0x18] sm:$0xff]
  %v336 = vpack.c.bf16 %v333, %v332
  %v337 = vpack.c.bf16 %v335, %v334
  %v338 = vld [vmem:[%s7] sm:$0xff]
  %v339 = vld [vmem:[%s7 + $0x8] sm:$0xff]
  %v340 = vld [vmem:[%s7 + $0x10] sm:$0xff]
  %v341 = vld [vmem:[%s7 + $0x18] sm:$0xff]
  %v342 = vpack.c.bf16 %v339, %v338
  %v343 = vpack.c.bf16 %v341, %v340
  %v344 = vld [vmem:[%s2] sm:$0xff]
  %v345 = vpack.c.bf16 %v344, %v344
  %vm346 = vcmask 261120
  %v348 = vsel %vm346, %v345, 0
  %350 = vmatprep.subr.bf16.mxu0 0
  %351 = vmatpush1.bf16.msra.mxu0 0
  %352 = vmatprep.subr.bf16.mxu0 0
  %353 = vmatpush1.bf16.msra.mxu0 0
  %354 = vmatprep.subr.bf16.mxu0 0
  %355 = vmatpush1.bf16.msra.mxu0 0
  %356 = vmatprep.subr.bf16.mxu0 0
  %357 = vmatpush1.bf16.msra.mxu0 0
  %358 = vmatprep.subr.bf16.mxu0 0
  %359 = vmatpush1.bf16.msra.mxu0 0
  %360 = vmatprep.subr.bf16.mxu0 0
  %361 = vmatpush1.bf16.msra.mxu0 0
  %362 = vmatprep.subr.bf16.mxu0 0
  %363 = vmatpush1.bf16.msra.mxu0 %v337
  %364 = vmatprep.subr.bf16.mxu0 0
  %365 = vmatpush1.bf16.msra.mxu0 %v336
  %366 = vmatprep.subr.bf16.mxu0 0
  %367 = vmatpush2.bf16.msra.mxu0 0
  %368 = vmatprep.subr.bf16.mxu0 0
  %369 = vmatpush2.bf16.msra.mxu0 0
  %370 = vmatprep.subr.bf16.mxu0 0
  %371 = vmatpush2.bf16.msra.mxu0 0
  %372 = vmatprep.subr.bf16.mxu0 0
  %373 = vmatpush2.bf16.msra.mxu0 0
  %374 = vmatprep.subr.bf16.mxu0 0
  %375 = vmatpush2.bf16.msra.mxu0 0
  %376 = vmatprep.subr.bf16.mxu0 0
  %377 = vmatpush2.bf16.msra.mxu0 0
  %378 = vmatprep.subr.bf16.mxu0 0
  %379 = vmatpush2.bf16.msra.mxu0 0
  %380 = vmatprep.subr.bf16.mxu0 0
  %381 = vmatpush2.bf16.msra.mxu0 0
  %382 = vmatprep.mubr.bf16.mxu0 0
  %383 = vmatmul.mubr.bf16.gmra.mxu0 %v348
  %v384 = vpop.f32.mrf.mxu0
  %v385 = vadd.f32 0.0, %v384
  %v386 = vpop.f32.mrf.mxu0
  %v387 = vpop.f32.mrf.mxu0
  %v388 = vpop.f32.mrf.mxu0
  %389 = vdwg.mxu0
  %v390 = vadd.f32 %v148, %v385
  %v391 = vtanh.pop %v390
  %v392 = vpack.c.bf16 %v391, %v391
  %v394 = vsel %vm346, %v392, 0
  %396 = vmatprep.subr.bf16.mxu0 0
  %397 = vmatpush1.bf16.msra.mxu0 0
  %398 = vmatprep.subr.bf16.mxu0 0
  %399 = vmatpush1.bf16.msra.mxu0 0
  %400 = vmatprep.subr.bf16.mxu0 0
  %401 = vmatpush1.bf16.msra.mxu0 0
  %402 = vmatprep.subr.bf16.mxu0 0
  %403 = vmatpush1.bf16.msra.mxu0 0
  %404 = vmatprep.subr.bf16.mxu0 0
  %405 = vmatpush1.bf16.msra.mxu0 0
  %406 = vmatprep.subr.bf16.mxu0 0
  %407 = vmatpush1.bf16.msra.mxu0 0
  %408 = vmatprep.subr.bf16.mxu0 0
  %409 = vmatpush1.bf16.msra.mxu0 %v337
  %410 = vmatprep.subr.bf16.mxu0 0
  %411 = vmatpush1.bf16.msra.mxu0 %v336
  %412 = vmatprep.subr.bf16.mxu0 0
  %413 = vmatpush2.bf16.msra.mxu0 0
  %414 = vmatprep.subr.bf16.mxu0 0
  %415 = vmatpush2.bf16.msra.mxu0 0
  %416 = vmatprep.subr.bf16.mxu0 0
  %417 = vmatpush2.bf16.msra.mxu0 0
  %418 = vmatprep.subr.bf16.mxu0 0
  %419 = vmatpush2.bf16.msra.mxu0 0
  %420 = vmatprep.subr.bf16.mxu0 0
  %421 = vmatpush2.bf16.msra.mxu0 0
  %422 = vmatprep.subr.bf16.mxu0 0
  %423 = vmatpush2.bf16.msra.mxu0 0
  %424 = vmatprep.subr.bf16.mxu0 0
  %425 = vmatpush2.bf16.msra.mxu0 0
  %426 = vmatprep.subr.bf16.mxu0 0
  %427 = vmatpush2.bf16.msra.mxu0 0
  %428 = vmatprep.mubr.bf16.mxu0 0
  %429 = vmatmul.mubr.bf16.gmra.mxu0 %v394
  %v430 = vpop.f32.mrf.mxu0
  %v431 = vadd.f32 0.0, %v430
  %v432 = vpop.f32.mrf.mxu0
  %v433 = vpop.f32.mrf.mxu0
  %v434 = vpop.f32.mrf.mxu0
  %435 = vdwg.mxu0
  %v436 = vadd.f32 %v153, %v431
  %v437 = vtanh.pop %v436
  %v438 = vpack.c.bf16 %v437, %v437
  %v440 = vsel %vm346, %v438, 0
  %442 = vmatprep.subr.bf16.mxu0 0
  %443 = vmatpush1.bf16.msra.mxu0 0
  %444 = vmatprep.subr.bf16.mxu0 0
  %445 = vmatpush1.bf16.msra.mxu0 0
  %446 = vmatprep.subr.bf16.mxu0 0
  %447 = vmatpush1.bf16.msra.mxu0 0
  %448 = vmatprep.subr.bf16.mxu0 0
  %449 = vmatpush1.bf16.msra.mxu0 0
  %450 = vmatprep.subr.bf16.mxu0 0
  %451 = vmatpush1.bf16.msra.mxu0 0
  %452 = vmatprep.subr.bf16.mxu0 0
  %453 = vmatpush1.bf16.msra.mxu0 0
  %454 = vmatprep.subr.bf16.mxu0 0
  %455 = vmatpush1.bf16.msra.mxu0 %v337
  %456 = vmatprep.subr.bf16.mxu0 0
  %457 = vmatpush1.bf16.msra.mxu0 %v336
  %458 = vmatprep.subr.bf16.mxu0 0
  %459 = vmatpush2.bf16.msra.mxu0 0
  %460 = vmatprep.subr.bf16.mxu0 0
  %461 = vmatpush2.bf16.msra.mxu0 0
  %462 = vmatprep.subr.bf16.mxu0 0
  %463 = vmatpush2.bf16.msra.mxu0 0
  %464 = vmatprep.subr.bf16.mxu0 0
  %465 = vmatpush2.bf16.msra.mxu0 0
  %466 = vmatprep.subr.bf16.mxu0 0
  %467 = vmatpush2.bf16.msra.mxu0 0
  %468 = vmatprep.subr.bf16.mxu0 0
  %469 = vmatpush2.bf16.msra.mxu0 0
  %470 = vmatprep.subr.bf16.mxu0 0
  %471 = vmatpush2.bf16.msra.mxu0 0
  %472 = vmatprep.subr.bf16.mxu0 0
  %473 = vmatpush2.bf16.msra.mxu0 0
  %474 = vmatprep.mubr.bf16.mxu0 0
  %475 = vmatmul.mubr.bf16.gmra.mxu0 %v440
  %v476 = vpop.f32.mrf.mxu0
  %v477 = vadd.f32 0.0, %v476
  %v478 = vpop.f32.mrf.mxu0
  %v479 = vpop.f32.mrf.mxu0
  %v480 = vpop.f32.mrf.mxu0
  %481 = vdwg.mxu0
  %v482 = vadd.f32 %v158, %v477
  %v483 = vtanh.pop %v482
  %v484 = vpack.c.bf16 %v483, %v483
  %v486 = vsel %vm346, %v484, 0
  %488 = vmatprep.subr.bf16.mxu0 0
  %489 = vmatpush1.bf16.msra.mxu0 0
  %490 = vmatprep.subr.bf16.mxu0 0
  %491 = vmatpush1.bf16.msra.mxu0 0
  %492 = vmatprep.subr.bf16.mxu0 0
  %493 = vmatpush1.bf16.msra.mxu0 0
  %494 = vmatprep.subr.bf16.mxu0 0
  %495 = vmatpush1.bf16.msra.mxu0 0
  %496 = vmatprep.subr.bf16.mxu0 0
  %497 = vmatpush1.bf16.msra.mxu0 0
  %498 = vmatprep.subr.bf16.mxu0 0
  %499 = vmatpush1.bf16.msra.mxu0 0
  %500 = vmatprep.subr.bf16.mxu0 0
  %501 = vmatpush1.bf16.msra.mxu0 %v337
  %502 = vmatprep.subr.bf16.mxu0 0
  %503 = vmatpush1.bf16.msra.mxu0 %v336
  %504 = vmatprep.subr.bf16.mxu0 0
  %505 = vmatpush2.bf16.msra.mxu0 0
  %506 = vmatprep.subr.bf16.mxu0 0
  %507 = vmatpush2.bf16.msra.mxu0 0
  %508 = vmatprep.subr.bf16.mxu0 0
  %509 = vmatpush2.bf16.msra.mxu0 0
  %510 = vmatprep.subr.bf16.mxu0 0
  %511 = vmatpush2.bf16.msra.mxu0 0
  %512 = vmatprep.subr.bf16.mxu0 0
  %513 = vmatpush2.bf16.msra.mxu0 0
  %514 = vmatprep.subr.bf16.mxu0 0
  %515 = vmatpush2.bf16.msra.mxu0 0
  %516 = vmatprep.subr.bf16.mxu0 0
  %517 = vmatpush2.bf16.msra.mxu0 0
  %518 = vmatprep.subr.bf16.mxu0 0
  %519 = vmatpush2.bf16.msra.mxu0 0
  %520 = vmatprep.mubr.bf16.mxu0 0
  %521 = vmatmul.mubr.bf16.gmra.mxu0 %v486
  %v522 = vpop.f32.mrf.mxu0
  %v523 = vadd.f32 0.0, %v522
  %v524 = vpop.f32.mrf.mxu0
  %v525 = vpop.f32.mrf.mxu0
  %v526 = vpop.f32.mrf.mxu0
  %527 = vdwg.mxu0
  %v528 = vadd.f32 %v163, %v523
  %v529 = vtanh.pop %v528
  %v530 = vpack.c.bf16 %v529, %v529
  %v532 = vsel %vm346, %v530, 0
  %534 = vmatprep.subr.bf16.mxu0 0
  %535 = vmatpush1.bf16.msra.mxu0 0
  %536 = vmatprep.subr.bf16.mxu0 0
  %537 = vmatpush1.bf16.msra.mxu0 0
  %538 = vmatprep.subr.bf16.mxu0 0
  %539 = vmatpush1.bf16.msra.mxu0 0
  %540 = vmatprep.subr.bf16.mxu0 0
  %541 = vmatpush1.bf16.msra.mxu0 0
  %542 = vmatprep.subr.bf16.mxu0 0
  %543 = vmatpush1.bf16.msra.mxu0 0
  %544 = vmatprep.subr.bf16.mxu0 0
  %545 = vmatpush1.bf16.msra.mxu0 0
  %546 = vmatprep.subr.bf16.mxu0 0
  %547 = vmatpush1.bf16.msra.mxu0 %v337
  %548 = vmatprep.subr.bf16.mxu0 0
  %549 = vmatpush1.bf16.msra.mxu0 %v336
  %550 = vmatprep.subr.bf16.mxu0 0
  %551 = vmatpush2.bf16.msra.mxu0 0
  %552 = vmatprep.subr.bf16.mxu0 0
  %553 = vmatpush2.bf16.msra.mxu0 0
  %554 = vmatprep.subr.bf16.mxu0 0
  %555 = vmatpush2.bf16.msra.mxu0 0
  %556 = vmatprep.subr.bf16.mxu0 0
  %557 = vmatpush2.bf16.msra.mxu0 0
  %558 = vmatprep.subr.bf16.mxu0 0
  %559 = vmatpush2.bf16.msra.mxu0 0
  %560 = vmatprep.subr.bf16.mxu0 0
  %561 = vmatpush2.bf16.msra.mxu0 0
  %562 = vmatprep.subr.bf16.mxu0 0
  %563 = vmatpush2.bf16.msra.mxu0 0
  %564 = vmatprep.subr.bf16.mxu0 0
  %565 = vmatpush2.bf16.msra.mxu0 0
  %566 = vmatprep.mubr.bf16.mxu0 0
  %567 = vmatmul.mubr.bf16.gmra.mxu0 %v532
  %v568 = vpop.f32.mrf.mxu0
  %v569 = vadd.f32 0.0, %v568
  %v570 = vpop.f32.mrf.mxu0
  %v571 = vpop.f32.mrf.mxu0
  %v572 = vpop.f32.mrf.mxu0
  %573 = vdwg.mxu0
  %v574 = vadd.f32 %v168, %v569
  %v575 = vtanh.pop %v574
  %v576 = vpack.c.bf16 %v575, %v575
  %v578 = vsel %vm346, %v576, 0
  %580 = vmatprep.subr.bf16.mxu0 0
  %581 = vmatpush1.bf16.msra.mxu0 0
  %582 = vmatprep.subr.bf16.mxu0 0
  %583 = vmatpush1.bf16.msra.mxu0 0
  %584 = vmatprep.subr.bf16.mxu0 0
  %585 = vmatpush1.bf16.msra.mxu0 0
  %586 = vmatprep.subr.bf16.mxu0 0
  %587 = vmatpush1.bf16.msra.mxu0 0
  %588 = vmatprep.subr.bf16.mxu0 0
  %589 = vmatpush1.bf16.msra.mxu0 0
  %590 = vmatprep.subr.bf16.mxu0 0
  %591 = vmatpush1.bf16.msra.mxu0 0
  %592 = vmatprep.subr.bf16.mxu0 0
  %593 = vmatpush1.bf16.msra.mxu0 %v337
  %594 = vmatprep.subr.bf16.mxu0 0
  %595 = vmatpush1.bf16.msra.mxu0 %v336
  %596 = vmatprep.subr.bf16.mxu0 0
  %597 = vmatpush2.bf16.msra.mxu0 0
  %598 = vmatprep.subr.bf16.mxu0 0
  %599 = vmatpush2.bf16.msra.mxu0 0
  %600 = vmatprep.subr.bf16.mxu0 0
  %601 = vmatpush2.bf16.msra.mxu0 0
  %602 = vmatprep.subr.bf16.mxu0 0
  %603 = vmatpush2.bf16.msra.mxu0 0
  %604 = vmatprep.subr.bf16.mxu0 0
  %605 = vmatpush2.bf16.msra.mxu0 0
  %606 = vmatprep.subr.bf16.mxu0 0
  %607 = vmatpush2.bf16.msra.mxu0 0
  %608 = vmatprep.subr.bf16.mxu0 0
  %609 = vmatpush2.bf16.msra.mxu0 0
  %610 = vmatprep.subr.bf16.mxu0 0
  %611 = vmatpush2.bf16.msra.mxu0 0
  %612 = vmatprep.mubr.bf16.mxu0 0
  %613 = vmatmul.mubr.bf16.gmra.mxu0 %v578
  %v614 = vpop.f32.mrf.mxu0
  %v615 = vadd.f32 0.0, %v614
  %v616 = vpop.f32.mrf.mxu0
  %v617 = vpop.f32.mrf.mxu0
  %v618 = vpop.f32.mrf.mxu0
  %619 = vdwg.mxu0
  %v620 = vadd.f32 %v173, %v615
  %v621 = vtanh.pop %v620
  %v622 = vpack.c.bf16 %v621, %v621
  %v624 = vsel %vm346, %v622, 0
  %626 = vmatprep.subr.bf16.mxu0 0
  %627 = vmatpush1.bf16.msra.mxu0 0
  %628 = vmatprep.subr.bf16.mxu0 0
  %629 = vmatpush1.bf16.msra.mxu0 0
  %630 = vmatprep.subr.bf16.mxu0 0
  %631 = vmatpush1.bf16.msra.mxu0 0
  %632 = vmatprep.subr.bf16.mxu0 0
  %633 = vmatpush1.bf16.msra.mxu0 0
  %634 = vmatprep.subr.bf16.mxu0 0
  %635 = vmatpush1.bf16.msra.mxu0 0
  %636 = vmatprep.subr.bf16.mxu0 0
  %637 = vmatpush1.bf16.msra.mxu0 0
  %638 = vmatprep.subr.bf16.mxu0 0
  %639 = vmatpush1.bf16.msra.mxu0 %v337
  %640 = vmatprep.subr.bf16.mxu0 0
  %641 = vmatpush1.bf16.msra.mxu0 %v336
  %642 = vmatprep.subr.bf16.mxu0 0
  %643 = vmatpush2.bf16.msra.mxu0 0
  %644 = vmatprep.subr.bf16.mxu0 0
  %645 = vmatpush2.bf16.msra.mxu0 0
  %646 = vmatprep.subr.bf16.mxu0 0
  %647 = vmatpush2.bf16.msra.mxu0 0
  %648 = vmatprep.subr.bf16.mxu0 0
  %649 = vmatpush2.bf16.msra.mxu0 0
  %650 = vmatprep.subr.bf16.mxu0 0
  %651 = vmatpush2.bf16.msra.mxu0 0
  %652 = vmatprep.subr.bf16.mxu0 0
  %653 = vmatpush2.bf16.msra.mxu0 0
  %654 = vmatprep.subr.bf16.mxu0 0
  %655 = vmatpush2.bf16.msra.mxu0 0
  %656 = vmatprep.subr.bf16.mxu0 0
  %657 = vmatpush2.bf16.msra.mxu0 0
  %658 = vmatprep.mubr.bf16.mxu0 0
  %659 = vmatmul.mubr.bf16.gmra.mxu0 %v624
  %v660 = vpop.f32.mrf.mxu0
  %v661 = vadd.f32 0.0, %v660
  %v662 = vpop.f32.mrf.mxu0
  %v663 = vpop.f32.mrf.mxu0
  %v664 = vpop.f32.mrf.mxu0
  %665 = vdwg.mxu0
  %v666 = vadd.f32 %v178, %v661
  %v667 = vtanh.pop %v666
  %v668 = vpack.c.bf16 %v667, %v667
  %v670 = vsel %vm346, %v668, 0
  %672 = vmatprep.subr.bf16.mxu0 0
  %673 = vmatpush1.bf16.msra.mxu0 0
  %674 = vmatprep.subr.bf16.mxu0 0
  %675 = vmatpush1.bf16.msra.mxu0 0
  %676 = vmatprep.subr.bf16.mxu0 0
  %677 = vmatpush1.bf16.msra.mxu0 0
  %678 = vmatprep.subr.bf16.mxu0 0
  %679 = vmatpush1.bf16.msra.mxu0 0
  %680 = vmatprep.subr.bf16.mxu0 0
  %681 = vmatpush1.bf16.msra.mxu0 0
  %682 = vmatprep.subr.bf16.mxu0 0
  %683 = vmatpush1.bf16.msra.mxu0 0
  %684 = vmatprep.subr.bf16.mxu0 0
  %685 = vmatpush1.bf16.msra.mxu0 %v337
  %686 = vmatprep.subr.bf16.mxu0 0
  %687 = vmatpush1.bf16.msra.mxu0 %v336
  %688 = vmatprep.subr.bf16.mxu0 0
  %689 = vmatpush2.bf16.msra.mxu0 0
  %690 = vmatprep.subr.bf16.mxu0 0
  %691 = vmatpush2.bf16.msra.mxu0 0
  %692 = vmatprep.subr.bf16.mxu0 0
  %693 = vmatpush2.bf16.msra.mxu0 0
  %694 = vmatprep.subr.bf16.mxu0 0
  %695 = vmatpush2.bf16.msra.mxu0 0
  %696 = vmatprep.subr.bf16.mxu0 0
  %697 = vmatpush2.bf16.msra.mxu0 0
  %698 = vmatprep.subr.bf16.mxu0 0
  %699 = vmatpush2.bf16.msra.mxu0 0
  %700 = vmatprep.subr.bf16.mxu0 0
  %701 = vmatpush2.bf16.msra.mxu0 0
  %702 = vmatprep.subr.bf16.mxu0 0
  %703 = vmatpush2.bf16.msra.mxu0 0
  %704 = vmatprep.mubr.bf16.mxu0 0
  %705 = vmatmul.mubr.bf16.gmra.mxu0 %v670
  %v706 = vpop.f32.mrf.mxu0
  %v707 = vadd.f32 0.0, %v706
  %v708 = vpop.f32.mrf.mxu0
  %v709 = vpop.f32.mrf.mxu0
  %v710 = vpop.f32.mrf.mxu0
  %711 = vdwg.mxu0
  %v712 = vadd.f32 %v183, %v707
  %v713 = vtanh.pop %v712
  %v714 = vpack.c.bf16 %v713, %v713
  %v716 = vsel %vm346, %v714, 0
  %718 = vmatprep.subr.bf16.mxu0 0
  %719 = vmatpush1.bf16.msra.mxu0 0
  %720 = vmatprep.subr.bf16.mxu0 0
  %721 = vmatpush1.bf16.msra.mxu0 0
  %722 = vmatprep.subr.bf16.mxu0 0
  %723 = vmatpush1.bf16.msra.mxu0 0
  %724 = vmatprep.subr.bf16.mxu0 0
  %725 = vmatpush1.bf16.msra.mxu0 0
  %726 = vmatprep.subr.bf16.mxu0 0
  %727 = vmatpush1.bf16.msra.mxu0 0
  %728 = vmatprep.subr.bf16.mxu0 0
  %729 = vmatpush1.bf16.msra.mxu0 0
  %730 = vmatprep.subr.bf16.mxu0 0
  %731 = vmatpush1.bf16.msra.mxu0 %v343
  %732 = vmatprep.subr.bf16.mxu0 0
  %733 = vmatpush1.bf16.msra.mxu0 %v342
  %734 = vmatprep.subr.bf16.mxu0 0
  %735 = vmatpush2.bf16.msra.mxu0 0
  %736 = vmatprep.subr.bf16.mxu0 0
  %737 = vmatpush2.bf16.msra.mxu0 0
  %738 = vmatprep.subr.bf16.mxu0 0
  %739 = vmatpush2.bf16.msra.mxu0 0
  %740 = vmatprep.subr.bf16.mxu0 0
  %741 = vmatpush2.bf16.msra.mxu0 0
  %742 = vmatprep.subr.bf16.mxu0 0
  %743 = vmatpush2.bf16.msra.mxu0 0
  %744 = vmatprep.subr.bf16.mxu0 0
  %745 = vmatpush2.bf16.msra.mxu0 0
  %746 = vmatprep.subr.bf16.mxu0 0
  %747 = vmatpush2.bf16.msra.mxu0 0
  %748 = vmatprep.subr.bf16.mxu0 0
  %749 = vmatpush2.bf16.msra.mxu0 0
  %750 = vmatprep.mubr.bf16.mxu0 0
  %751 = vmatmul.mubr.bf16.gmra.mxu0 %v716
  %v752 = vpop.f32.mrf.mxu0
  %v753 = vadd.f32 0.0, %v752
  %v754 = vpop.f32.mrf.mxu0
  %v755 = vpop.f32.mrf.mxu0
  %v756 = vpop.f32.mrf.mxu0
  %757 = vdwg.mxu0
  %v758 = vadd.f32 %v294, %v753
  %v759 = vtanh.pop %v758
  %v760 = vpack.c.bf16 %v759, %v759
  %v762 = vsel %vm346, %v760, 0
  %764 = vmatprep.subr.bf16.mxu0 0
  %765 = vmatpush1.bf16.msra.mxu0 0
  %766 = vmatprep.subr.bf16.mxu0 0
  %767 = vmatpush1.bf16.msra.mxu0 0
  %768 = vmatprep.subr.bf16.mxu0 0
  %769 = vmatpush1.bf16.msra.mxu0 0
  %770 = vmatprep.subr.bf16.mxu0 0
  %771 = vmatpush1.bf16.msra.mxu0 0
  %772 = vmatprep.subr.bf16.mxu0 0
  %773 = vmatpush1.bf16.msra.mxu0 0
  %774 = vmatprep.subr.bf16.mxu0 0
  %775 = vmatpush1.bf16.msra.mxu0 0
  %776 = vmatprep.subr.bf16.mxu0 0
  %777 = vmatpush1.bf16.msra.mxu0 %v343
  %778 = vmatprep.subr.bf16.mxu0 0
  %779 = vmatpush1.bf16.msra.mxu0 %v342
  %780 = vmatprep.subr.bf16.mxu0 0
  %781 = vmatpush2.bf16.msra.mxu0 0
  %782 = vmatprep.subr.bf16.mxu0 0
  %783 = vmatpush2.bf16.msra.mxu0 0
  %784 = vmatprep.subr.bf16.mxu0 0
  %785 = vmatpush2.bf16.msra.mxu0 0
  %786 = vmatprep.subr.bf16.mxu0 0
  %787 = vmatpush2.bf16.msra.mxu0 0
  %788 = vmatprep.subr.bf16.mxu0 0
  %789 = vmatpush2.bf16.msra.mxu0 0
  %790 = vmatprep.subr.bf16.mxu0 0
  %791 = vmatpush2.bf16.msra.mxu0 0
  %792 = vmatprep.subr.bf16.mxu0 0
  %793 = vmatpush2.bf16.msra.mxu0 0
  %794 = vmatprep.subr.bf16.mxu0 0
  %795 = vmatpush2.bf16.msra.mxu0 0
  %796 = vmatprep.mubr.bf16.mxu0 0
  %797 = vmatmul.mubr.bf16.gmra.mxu0 %v762
  %v798 = vpop.f32.mrf.mxu0
  %v799 = vadd.f32 0.0, %v798
  %v800 = vpop.f32.mrf.mxu0
  %v801 = vpop.f32.mrf.mxu0
  %v802 = vpop.f32.mrf.mxu0
  %803 = vdwg.mxu0
  %v804 = vadd.f32 %v299, %v799
  %v805 = vtanh.pop %v804
  %v806 = vpack.c.bf16 %v805, %v805
  %v808 = vsel %vm346, %v806, 0
  %810 = vmatprep.subr.bf16.mxu0 0
  %811 = vmatpush1.bf16.msra.mxu0 0
  %812 = vmatprep.subr.bf16.mxu0 0
  %813 = vmatpush1.bf16.msra.mxu0 0
  %814 = vmatprep.subr.bf16.mxu0 0
  %815 = vmatpush1.bf16.msra.mxu0 0
  %816 = vmatprep.subr.bf16.mxu0 0
  %817 = vmatpush1.bf16.msra.mxu0 0
  %818 = vmatprep.subr.bf16.mxu0 0
  %819 = vmatpush1.bf16.msra.mxu0 0
  %820 = vmatprep.subr.bf16.mxu0 0
  %821 = vmatpush1.bf16.msra.mxu0 0
  %822 = vmatprep.subr.bf16.mxu0 0
  %823 = vmatpush1.bf16.msra.mxu0 %v343
  %824 = vmatprep.subr.bf16.mxu0 0
  %825 = vmatpush1.bf16.msra.mxu0 %v342
  %826 = vmatprep.subr.bf16.mxu0 0
  %827 = vmatpush2.bf16.msra.mxu0 0
  %828 = vmatprep.subr.bf16.mxu0 0
  %829 = vmatpush2.bf16.msra.mxu0 0
  %830 = vmatprep.subr.bf16.mxu0 0
  %831 = vmatpush2.bf16.msra.mxu0 0
  %832 = vmatprep.subr.bf16.mxu0 0
  %833 = vmatpush2.bf16.msra.mxu0 0
  %834 = vmatprep.subr.bf16.mxu0 0
  %835 = vmatpush2.bf16.msra.mxu0 0
  %836 = vmatprep.subr.bf16.mxu0 0
  %837 = vmatpush2.bf16.msra.mxu0 0
  %838 = vmatprep.subr.bf16.mxu0 0
  %839 = vmatpush2.bf16.msra.mxu0 0
  %840 = vmatprep.subr.bf16.mxu0 0
  %841 = vmatpush2.bf16.msra.mxu0 0
  %842 = vmatprep.mubr.bf16.mxu0 0
  %843 = vmatmul.mubr.bf16.gmra.mxu0 %v808
  %v844 = vpop.f32.mrf.mxu0
  %v845 = vadd.f32 0.0, %v844
  %v846 = vpop.f32.mrf.mxu0
  %v847 = vpop.f32.mrf.mxu0
  %v848 = vpop.f32.mrf.mxu0
  %849 = vdwg.mxu0
  %v850 = vadd.f32 %v304, %v845
  %v851 = vtanh.pop %v850
  %v852 = vpack.c.bf16 %v851, %v851
  %v854 = vsel %vm346, %v852, 0
  %856 = vmatprep.subr.bf16.mxu0 0
  %857 = vmatpush1.bf16.msra.mxu0 0
  %858 = vmatprep.subr.bf16.mxu0 0
  %859 = vmatpush1.bf16.msra.mxu0 0
  %860 = vmatprep.subr.bf16.mxu0 0
  %861 = vmatpush1.bf16.msra.mxu0 0
  %862 = vmatprep.subr.bf16.mxu0 0
  %863 = vmatpush1.bf16.msra.mxu0 0
  %864 = vmatprep.subr.bf16.mxu0 0
  %865 = vmatpush1.bf16.msra.mxu0 0
  %866 = vmatprep.subr.bf16.mxu0 0
  %867 = vmatpush1.bf16.msra.mxu0 0
  %868 = vmatprep.subr.bf16.mxu0 0
  %869 = vmatpush1.bf16.msra.mxu0 %v343
  %870 = vmatprep.subr.bf16.mxu0 0
  %871 = vmatpush1.bf16.msra.mxu0 %v342
  %872 = vmatprep.subr.bf16.mxu0 0
  %873 = vmatpush2.bf16.msra.mxu0 0
  %874 = vmatprep.subr.bf16.mxu0 0
  %875 = vmatpush2.bf16.msra.mxu0 0
  %876 = vmatprep.subr.bf16.mxu0 0
  %877 = vmatpush2.bf16.msra.mxu0 0
  %878 = vmatprep.subr.bf16.mxu0 0
  %879 = vmatpush2.bf16.msra.mxu0 0
  %880 = vmatprep.subr.bf16.mxu0 0
  %881 = vmatpush2.bf16.msra.mxu0 0
  %882 = vmatprep.subr.bf16.mxu0 0
  %883 = vmatpush2.bf16.msra.mxu0 0
  %884 = vmatprep.subr.bf16.mxu0 0
  %885 = vmatpush2.bf16.msra.mxu0 0
  %886 = vmatprep.subr.bf16.mxu0 0
  %887 = vmatpush2.bf16.msra.mxu0 0
  %888 = vmatprep.mubr.bf16.mxu0 0
  %889 = vmatmul.mubr.bf16.gmra.mxu0 %v854
  %v890 = vpop.f32.mrf.mxu0
  %v891 = vadd.f32 0.0, %v890
  %v892 = vpop.f32.mrf.mxu0
  %v893 = vpop.f32.mrf.mxu0
  %v894 = vpop.f32.mrf.mxu0
  %895 = vdwg.mxu0
  %v896 = vadd.f32 %v309, %v891
  %v897 = vtanh.pop %v896
  %v898 = vpack.c.bf16 %v897, %v897
  %v900 = vsel %vm346, %v898, 0
  %902 = vmatprep.subr.bf16.mxu0 0
  %903 = vmatpush1.bf16.msra.mxu0 0
  %904 = vmatprep.subr.bf16.mxu0 0
  %905 = vmatpush1.bf16.msra.mxu0 0
  %906 = vmatprep.subr.bf16.mxu0 0
  %907 = vmatpush1.bf16.msra.mxu0 0
  %908 = vmatprep.subr.bf16.mxu0 0
  %909 = vmatpush1.bf16.msra.mxu0 0
  %910 = vmatprep.subr.bf16.mxu0 0
  %911 = vmatpush1.bf16.msra.mxu0 0
  %912 = vmatprep.subr.bf16.mxu0 0
  %913 = vmatpush1.bf16.msra.mxu0 0
  %914 = vmatprep.subr.bf16.mxu0 0
  %915 = vmatpush1.bf16.msra.mxu0 %v343
  %916 = vmatprep.subr.bf16.mxu0 0
  %917 = vmatpush1.bf16.msra.mxu0 %v342
  %918 = vmatprep.subr.bf16.mxu0 0
  %919 = vmatpush2.bf16.msra.mxu0 0
  %920 = vmatprep.subr.bf16.mxu0 0
  %921 = vmatpush2.bf16.msra.mxu0 0
  %922 = vmatprep.subr.bf16.mxu0 0
  %923 = vmatpush2.bf16.msra.mxu0 0
  %924 = vmatprep.subr.bf16.mxu0 0
  %925 = vmatpush2.bf16.msra.mxu0 0
  %926 = vmatprep.subr.bf16.mxu0 0
  %927 = vmatpush2.bf16.msra.mxu0 0
  %928 = vmatprep.subr.bf16.mxu0 0
  %929 = vmatpush2.bf16.msra.mxu0 0
  %930 = vmatprep.subr.bf16.mxu0 0
  %931 = vmatpush2.bf16.msra.mxu0 0
  %932 = vmatprep.subr.bf16.mxu0 0
  %933 = vmatpush2.bf16.msra.mxu0 0
  %934 = vmatprep.mubr.bf16.mxu0 0
  %935 = vmatmul.mubr.bf16.gmra.mxu0 %v900
  %v936 = vpop.f32.mrf.mxu0
  %v937 = vadd.f32 0.0, %v936
  %v938 = vpop.f32.mrf.mxu0
  %v939 = vpop.f32.mrf.mxu0
  %v940 = vpop.f32.mrf.mxu0
  %941 = vdwg.mxu0
  %v942 = vadd.f32 %v314, %v937
  %v943 = vtanh.pop %v942
  %v944 = vpack.c.bf16 %v943, %v943
  %v946 = vsel %vm346, %v944, 0
  %948 = vmatprep.subr.bf16.mxu0 0
  %949 = vmatpush1.bf16.msra.mxu0 0
  %950 = vmatprep.subr.bf16.mxu0 0
  %951 = vmatpush1.bf16.msra.mxu0 0
  %952 = vmatprep.subr.bf16.mxu0 0
  %953 = vmatpush1.bf16.msra.mxu0 0
  %954 = vmatprep.subr.bf16.mxu0 0
  %955 = vmatpush1.bf16.msra.mxu0 0
  %956 = vmatprep.subr.bf16.mxu0 0
  %957 = vmatpush1.bf16.msra.mxu0 0
  %958 = vmatprep.subr.bf16.mxu0 0
  %959 = vmatpush1.bf16.msra.mxu0 0
  %960 = vmatprep.subr.bf16.mxu0 0
  %961 = vmatpush1.bf16.msra.mxu0 %v343
  %962 = vmatprep.subr.bf16.mxu0 0
  %963 = vmatpush1.bf16.msra.mxu0 %v342
  %964 = vmatprep.subr.bf16.mxu0 0
  %965 = vmatpush2.bf16.msra.mxu0 0
  %966 = vmatprep.subr.bf16.mxu0 0
  %967 = vmatpush2.bf16.msra.mxu0 0
  %968 = vmatprep.subr.bf16.mxu0 0
  %969 = vmatpush2.bf16.msra.mxu0 0
  %970 = vmatprep.subr.bf16.mxu0 0
  %971 = vmatpush2.bf16.msra.mxu0 0
  %972 = vmatprep.subr.bf16.mxu0 0
  %973 = vmatpush2.bf16.msra.mxu0 0
  %974 = vmatprep.subr.bf16.mxu0 0
  %975 = vmatpush2.bf16.msra.mxu0 0
  %976 = vmatprep.subr.bf16.mxu0 0
  %977 = vmatpush2.bf16.msra.mxu0 0
  %978 = vmatprep.subr.bf16.mxu0 0
  %979 = vmatpush2.bf16.msra.mxu0 0
  %980 = vmatprep.mubr.bf16.mxu0 0
  %981 = vmatmul.mubr.bf16.gmra.mxu0 %v946
  %v982 = vpop.f32.mrf.mxu0
  %v983 = vadd.f32 0.0, %v982
  %v984 = vpop.f32.mrf.mxu0
  %v985 = vpop.f32.mrf.mxu0
  %v986 = vpop.f32.mrf.mxu0
  %987 = vdwg.mxu0
  %v988 = vadd.f32 %v319, %v983
  %v989 = vtanh.pop %v988
  %v990 = vpack.c.bf16 %v989, %v989
  %v992 = vsel %vm346, %v990, 0
  %994 = vmatprep.subr.bf16.mxu0 0
  %995 = vmatpush1.bf16.msra.mxu0 0
  %996 = vmatprep.subr.bf16.mxu0 0
  %997 = vmatpush1.bf16.msra.mxu0 0
  %998 = vmatprep.subr.bf16.mxu0 0
  %999 = vmatpush1.bf16.msra.mxu0 0
  %1000 = vmatprep.subr.bf16.mxu0 0
  %1001 = vmatpush1.bf16.msra.mxu0 0
  %1002 = vmatprep.subr.bf16.mxu0 0
  %1003 = vmatpush1.bf16.msra.mxu0 0
  %1004 = vmatprep.subr.bf16.mxu0 0
  %1005 = vmatpush1.bf16.msra.mxu0 0
  %1006 = vmatprep.subr.bf16.mxu0 0
  %1007 = vmatpush1.bf16.msra.mxu0 %v343
  %1008 = vmatprep.subr.bf16.mxu0 0
  %1009 = vmatpush1.bf16.msra.mxu0 %v342
  %1010 = vmatprep.subr.bf16.mxu0 0
  %1011 = vmatpush2.bf16.msra.mxu0 0
  %1012 = vmatprep.subr.bf16.mxu0 0
  %1013 = vmatpush2.bf16.msra.mxu0 0
  %1014 = vmatprep.subr.bf16.mxu0 0
  %1015 = vmatpush2.bf16.msra.mxu0 0
  %1016 = vmatprep.subr.bf16.mxu0 0
  %1017 = vmatpush2.bf16.msra.mxu0 0
  %1018 = vmatprep.subr.bf16.mxu0 0
  %1019 = vmatpush2.bf16.msra.mxu0 0
  %1020 = vmatprep.subr.bf16.mxu0 0
  %1021 = vmatpush2.bf16.msra.mxu0 0
  %1022 = vmatprep.subr.bf16.mxu0 0
  %1023 = vmatpush2.bf16.msra.mxu0 0
  %1024 = vmatprep.subr.bf16.mxu0 0
  %1025 = vmatpush2.bf16.msra.mxu0 0
  %1026 = vmatprep.mubr.bf16.mxu0 0
  %1027 = vmatmul.mubr.bf16.gmra.mxu0 %v992
  %v1028 = vpop.f32.mrf.mxu0
  %v1029 = vadd.f32 0.0, %v1028
  %v1030 = vpop.f32.mrf.mxu0
  %v1031 = vpop.f32.mrf.mxu0
  %v1032 = vpop.f32.mrf.mxu0
  %1033 = vdwg.mxu0
  %v1034 = vadd.f32 %v324, %v1029
  %v1035 = vtanh.pop %v1034
  %v1036 = vpack.c.bf16 %v1035, %v1035
  %v1038 = vsel %vm346, %v1036, 0
  %1040 = vmatprep.subr.bf16.mxu0 0
  %1041 = vmatpush1.bf16.msra.mxu0 0
  %1042 = vmatprep.subr.bf16.mxu0 0
  %1043 = vmatpush1.bf16.msra.mxu0 0
  %1044 = vmatprep.subr.bf16.mxu0 0
  %1045 = vmatpush1.bf16.msra.mxu0 0
  %1046 = vmatprep.subr.bf16.mxu0 0
  %1047 = vmatpush1.bf16.msra.mxu0 0
  %1048 = vmatprep.subr.bf16.mxu0 0
  %1049 = vmatpush1.bf16.msra.mxu0 0
  %1050 = vmatprep.subr.bf16.mxu0 0
  %1051 = vmatpush1.bf16.msra.mxu0 0
  %1052 = vmatprep.subr.bf16.mxu0 0
  %1053 = vmatpush1.bf16.msra.mxu0 %v343
  %1054 = vmatprep.subr.bf16.mxu0 0
  %1055 = vmatpush1.bf16.msra.mxu0 %v342
  %1056 = vmatprep.subr.bf16.mxu0 0
  %1057 = vmatpush2.bf16.msra.mxu0 0
  %1058 = vmatprep.subr.bf16.mxu0 0
  %1059 = vmatpush2.bf16.msra.mxu0 0
  %1060 = vmatprep.subr.bf16.mxu0 0
  %1061 = vmatpush2.bf16.msra.mxu0 0
  %1062 = vmatprep.subr.bf16.mxu0 0
  %1063 = vmatpush2.bf16.msra.mxu0 0
  %1064 = vmatprep.subr.bf16.mxu0 0
  %1065 = vmatpush2.bf16.msra.mxu0 0
  %1066 = vmatprep.subr.bf16.mxu0 0
  %1067 = vmatpush2.bf16.msra.mxu0 0
  %1068 = vmatprep.subr.bf16.mxu0 0
  %1069 = vmatpush2.bf16.msra.mxu0 0
  %1070 = vmatprep.subr.bf16.mxu0 0
  %1071 = vmatpush2.bf16.msra.mxu0 0
  %1072 = vmatprep.mubr.bf16.mxu0 0
  %1073 = vmatmul.mubr.bf16.gmra.mxu0 %v1038
  %v1074 = vpop.f32.mrf.mxu0
  %v1075 = vadd.f32 0.0, %v1074
  %v1076 = vpop.f32.mrf.mxu0
  %v1077 = vpop.f32.mrf.mxu0
  %v1078 = vpop.f32.mrf.mxu0
  %1079 = vdwg.mxu0
  %v1080 = vadd.f32 %v329, %v1075
  %v1081 = vtanh.pop %v1080
  %v1082 = vld [vmem:[%s9] sm:$0xff]
  %v1083 = vld [vmem:[%s9 + $0x8] sm:$0xff]
  %v1084 = vld [vmem:[%s9 + $0x10] sm:$0xff]
  %v1085 = vld [vmem:[%s9 + $0x18] sm:$0xff]
  %v1086 = vld [vmem:[%s10] sm:$0x1]
  %v1088 = vlaneseq
  %v1089 = vshrl.u32 %v1088, 7
  %v1090 = vsub.s32 0, %v1089
  %v1091 = vrot.slane %v1086, %v1090
  %v1094 = vsel %vm346, %v759, 0
  %v1097 = vsel %vm346, %v805, 0
  %v1100 = vsel %vm346, %v851, 0
  %v1103 = vsel %vm346, %v897, 0
  %v1106 = vsel %vm346, %v943, 0
  %v1109 = vsel %vm346, %v989, 0
  %v1112 = vsel %vm346, %v1035, 0
  %v1115 = vsel %vm346, %v1081, 0
  %1117 = vmatprep.subr.mxu0 0.0
  %1118 = vmatpush1.msra.mxu0 0.0
  %1119 = vmatprep.subr.mxu0 0.0
  %1120 = vmatpush1.msra.mxu0 0.0
  %1121 = vmatprep.subr.mxu0 0.0
  %1122 = vmatpush1.msra.mxu0 0.0
  %1123 = vmatprep.subr.mxu0 0.0
  %1124 = vmatpush1.msra.mxu0 0.0
  %1125 = vmatprep.subr.mxu0 0.0
  %1126 = vmatpush1.msra.mxu0 0.0
  %1127 = vmatprep.subr.mxu0 0.0
  %1128 = vmatpush1.msra.mxu0 0.0
  %1129 = vmatprep.subr.mxu0 0.0
  %1130 = vmatpush1.msra.mxu0 0.0
  %1131 = vmatprep.subr.mxu0 0.0
  %1132 = vmatpush1.msra.mxu0 0.0
  %1133 = vmatprep.subr.mxu0 0.0
  %1134 = vmatpush1.msra.mxu0 0.0
  %1135 = vmatprep.subr.mxu0 0.0
  %1136 = vmatpush1.msra.mxu0 0.0
  %1137 = vmatprep.subr.mxu0 0.0
  %1138 = vmatpush1.msra.mxu0 0.0
  %1139 = vmatprep.subr.mxu0 0.0
  %1140 = vmatpush1.msra.mxu0 0.0
  %1141 = vmatprep.subr.mxu0 0.0
  %1142 = vmatpush1.msra.mxu0 %v1085
  %1143 = vmatprep.subr.mxu0 0.0
  %1144 = vmatpush1.msra.mxu0 %v1084
  %1145 = vmatprep.subr.mxu0 0.0
  %1146 = vmatpush1.msra.mxu0 %v1083
  %1147 = vmatprep.subr.mxu0 0.0
  %1148 = vmatpush1.msra.mxu0 %v1082
  %1149 = vmatprep.subr.mxu0 0.0
  %1150 = vmatpush2.msra.mxu0 0.0
  %1151 = vmatprep.subr.mxu0 0.0
  %1152 = vmatpush2.msra.mxu0 0.0
  %1153 = vmatprep.subr.mxu0 0.0
  %1154 = vmatpush2.msra.mxu0 0.0
  %1155 = vmatprep.subr.mxu0 0.0
  %1156 = vmatpush2.msra.mxu0 0.0
  %1157 = vmatprep.subr.mxu0 0.0
  %1158 = vmatpush2.msra.mxu0 0.0
  %1159 = vmatprep.subr.mxu0 0.0
  %1160 = vmatpush2.msra.mxu0 0.0
  %1161 = vmatprep.subr.mxu0 0.0
  %1162 = vmatpush2.msra.mxu0 0.0
  %1163 = vmatprep.subr.mxu0 0.0
  %1164 = vmatpush2.msra.mxu0 0.0
  %1165 = vmatprep.subr.mxu0 0.0
  %1166 = vmatpush2.msra.mxu0 0.0
  %1167 = vmatprep.subr.mxu0 0.0
  %1168 = vmatpush2.msra.mxu0 0.0
  %1169 = vmatprep.subr.mxu0 0.0
  %1170 = vmatpush2.msra.mxu0 0.0
  %1171 = vmatprep.subr.mxu0 0.0
  %1172 = vmatpush2.msra.mxu0 0.0
  %1173 = vmatprep.subr.mxu0 0.0
  %1174 = vmatpush2.msra.mxu0 0.0
  %1175 = vmatprep.subr.mxu0 0.0
  %1176 = vmatpush2.msra.mxu0 0.0
  %1177 = vmatprep.subr.mxu0 0.0
  %1178 = vmatpush2.msra.mxu0 0.0
  %1179 = vmatprep.subr.mxu0 0.0
  %1180 = vmatpush2.msra.mxu0 0.0
  %1181 = vmatprep.mubr.f32.mxu0 0.0
  %1182 = vmatmul.mubr.f32.gmra.mxu0 %v1094
  %v1183 = vpop.f32.mrf.mxu0
  %v1184 = vadd.f32 %v1091, %v1183
  %v1185 = vpop.f32.mrf.mxu0
  %1186 = vmatprep.mubr.f32.mxu0 0.0
  %1187 = vmatmul.mubr.f32.gmra.mxu0 %v1097
  %v1188 = vpop.f32.mrf.mxu0
  %v1189 = vadd.f32 %v1091, %v1188
  %v1190 = vpop.f32.mrf.mxu0
  %1191 = vmatprep.mubr.f32.mxu0 0.0
  %1192 = vmatmul.mubr.f32.gmra.mxu0 %v1100
  %v1193 = vpop.f32.mrf.mxu0
  %v1194 = vadd.f32 %v1091, %v1193
  %v1195 = vpop.f32.mrf.mxu0
  %1196 = vmatprep.mubr.f32.mxu0 0.0
  %1197 = vmatmul.mubr.f32.gmra.mxu0 %v1103
  %v1198 = vpop.f32.mrf.mxu0
  %v1199 = vadd.f32 %v1091, %v1198
  %v1200 = vpop.f32.mrf.mxu0
  %1201 = vmatprep.mubr.f32.mxu0 0.0
  %1202 = vmatmul.mubr.f32.gmra.mxu0 %v1106
  %v1203 = vpop.f32.mrf.mxu0
  %v1204 = vadd.f32 %v1091, %v1203
  %v1205 = vpop.f32.mrf.mxu0
  %1206 = vmatprep.mubr.f32.mxu0 0.0
  %1207 = vmatmul.mubr.f32.gmra.mxu0 %v1109
  %v1208 = vpop.f32.mrf.mxu0
  %v1209 = vadd.f32 %v1091, %v1208
  %v1210 = vpop.f32.mrf.mxu0
  %1211 = vmatprep.mubr.f32.mxu0 0.0
  %1212 = vmatmul.mubr.f32.gmra.mxu0 %v1112
  %v1213 = vpop.f32.mrf.mxu0
  %v1214 = vadd.f32 %v1091, %v1213
  %v1215 = vpop.f32.mrf.mxu0
  %1216 = vmatprep.mubr.f32.mxu0 0.0
  %1217 = vmatmul.mubr.f32.gmra.mxu0 %v1115
  %v1218 = vpop.f32.mrf.mxu0
  %v1219 = vadd.f32 %v1091, %v1218
  %v1220 = vpop.f32.mrf.mxu0
  %1221 = vdwg.mxu0
  %1222 = vst.msk [vmem:[%s11] sm:$0xff] %vm56, %v1184
  %1223 = vst.msk [vmem:[%s11 + $0x8] sm:$0xff] %vm56, %v1189
  %1224 = vst.msk [vmem:[%s11 + $0x10] sm:$0xff] %vm56, %v1194
  %1225 = vst.msk [vmem:[%s11 + $0x18] sm:$0xff] %vm56, %v1199
  %1226 = vst.msk [vmem:[%s11 + $0x20] sm:$0xff] %vm56, %v1204
  %1227 = vst.msk [vmem:[%s11 + $0x28] sm:$0xff] %vm56, %v1209
  %1228 = vst.msk [vmem:[%s11 + $0x30] sm:$0xff] %vm56, %v1214
  %1229 = vst.msk [vmem:[%s11 + $0x38] sm:$0xff] %vm56, %v1219
  // Predicated region
  $region46: #{tpu_custom_call.1} parent=0 // pred_check
    _
  $region47: #{tpu_custom_call.1} parent=0 // pred_check_branch
    %1231 = sbr.rel (0) target = $region49
  $region48: #{tpu_custom_call.1} parent=0 // pred_region
    _
  $region49: #{tpu_custom_call.1} parent=0 // pred_fallthru
    _
  // Predicated region
  $region50: #{tpu_custom_call.1} parent=0 // pred_check
    _
  $region51: #{tpu_custom_call.1} parent=0 // pred_check_branch
    %1233 = sbr.rel (0) target = $region53
  $region52: #{tpu_custom_call.1} parent=0 // pred_region
    _
  $region53: #{tpu_custom_call.1} parent=0 // pred_fallthru
    _

</llo_original>
